<compile_context>
chip_gen: v7x
topology: tpu7x:2x2x1
jax: 0.10.0
libtpu: 0.0.40
codegen_flags: <defaults>
</compile_context>

<pallas_src>
import math
import functools

import jax
import jax.numpy as jnp
from jax.experimental import pallas as pl
from jax.experimental.pallas import tpu as pltpu


# -----------------------------------------------------------------------------
# helpers
# -----------------------------------------------------------------------------
def _round_up(x, m):
    return (x + m - 1) // m * m


def _is_v5e():
    try:
        kind = jax.devices()[0].device_kind.lower()
    except Exception:
        return False
    return ("v5 lite" in kind) or ("v5e" in kind) or ("v5litepod" in kind)


def _pick_tile(dim, pref, align):
    """Full dim if it fits in one tile (no padding); else the largest aligned
    divisor <= pref; else pref (caller zero-pads the ragged edge)."""
    if dim <= pref:
        return dim
    t = (pref // align) * align
    while t >= align:
        if dim % t == 0:
            return t
        t -= align
    return pref


def _vmem_limit(est_bytes):
    # >= the 32 MiB default scoped limit (v6e/v7x), but stay safely under
    # v7x's 64 MiB physical VMEM.
    return int(min(56 * 1024 * 1024, max(2 * est_bytes, 32 * 1024 * 1024)))


# -----------------------------------------------------------------------------
# Kernel 1: tiled dense projection  o = x @ w (+ b),  w stored as (in, out)
# -----------------------------------------------------------------------------
def _linear_bias_kernel(x_ref, w_ref, b_ref, o_ref, acc_ref, *, mxu_dtype):
    k = pl.program_id(2)

    @pl.when(k == 0)
    def _():
        acc_ref[...] = jnp.zeros(acc_ref.shape, acc_ref.dtype)

    acc_ref[...] += jnp.dot(x_ref[...].astype(mxu_dtype),
                            w_ref[...].astype(mxu_dtype),
                            preferred_element_type=jnp.float32)

    @pl.when(k == pl.num_programs(2) - 1)
    def _():
        o_ref[...] = (acc_ref[...] + b_ref[...]).astype(o_ref.dtype)


def _linear_nobias_kernel(x_ref, w_ref, o_ref, acc_ref, *, mxu_dtype):
    k = pl.program_id(2)

    @pl.when(k == 0)
    def _():
        acc_ref[...] = jnp.zeros(acc_ref.shape, acc_ref.dtype)

    acc_ref[...] += jnp.dot(x_ref[...].astype(mxu_dtype),
                            w_ref[...].astype(mxu_dtype),
                            preferred_element_type=jnp.float32)

    @pl.when(k == pl.num_programs(2) - 1)
    def _():
        o_ref[...] = acc_ref[...].astype(o_ref.dtype)


def linear(x2d, w_io, bias=None, *, mxu_dtype=None, tm=None, tn=None, tk=None):
    """x2d: (M, K); w_io: (K, N) ('in x out', pre-transposed); bias: (N,) or None."""
    M, K = x2d.shape
    Kw, N = w_io.shape
    assert K == Kw
    out_dtype = x2d.dtype
    if mxu_dtype is None:
        mxu_dtype = x2d.dtype

    v5e = _is_v5e()
    tm = _pick_tile(M, tm if tm is not None else (128 if v5e else 256), 8)
    tn = _pick_tile(N, tn if tn is not None else (128 if v5e else 512), 128)
    tk = _pick_tile(K, tk if tk is not None else (128 if v5e else 512), 128)
    Mp, Np, Kp = _round_up(M, tm), _round_up(N, tn), _round_up(K, tk)

    # Zero-pad only ragged edges (padding is an extra HBM round-trip).
    if (Mp, Kp) != (M, K):
        x2d = jnp.pad(x2d, ((0, Mp - M), (0, Kp - K)))
    if (Kp, Np) != (K, N):
        w_io = jnp.pad(w_io, ((0, Kp - K), (0, Np - N)))

    grid = (Mp // tm, Np // tn, Kp // tk)
    itm = jnp.dtype(out_dtype).itemsize
    mxu_b = jnp.dtype(mxu_dtype).itemsize
    est = (2 * itm * (tm * tk + tk * tn + tm * tn)   # double-buffered I/O tiles
           + 4 * tm * tn                             # f32 accumulator scratch
           + 2 * mxu_b * (tm * tk + tk * tn))        # casted MXU operands
    cparams = pltpu.CompilerParams(
        dimension_semantics=("parallel", "parallel", "arbitrary"),
        vmem_limit_bytes=_vmem_limit(est))
    cost = pl.CostEstimate(flops=2 * Mp * Np * Kp, transcendentals=0,
                           bytes_accessed=itm * (Mp * Kp + Kp * Np + Mp * Np))

    x_spec = pl.BlockSpec((tm, tk), lambda i, j, k: (i, k))
    w_spec = pl.BlockSpec((tk, tn), lambda i, j, k: (k, j))
    o_spec = pl.BlockSpec((tm, tn), lambda i, j, k: (i, j))
    scratch = [pltpu.VMEM((tm, tn), jnp.float32)]

    if bias is None:
        out = pl.pallas_call(
            functools.partial(_linear_nobias_kernel, mxu_dtype=mxu_dtype),
            out_shape=jax.ShapeDtypeStruct((Mp, Np), out_dtype),
            grid=grid,
            in_specs=[x_spec, w_spec],
            out_specs=o_spec,
            scratch_shapes=scratch,
            compiler_params=cparams,
            cost_estimate=cost,
        )(x2d, w_io)
    else:
        b = bias.reshape(1, N)
        if Np != N:
            b = jnp.pad(b, ((0, 0), (0, Np - N)))
        b_spec = pl.BlockSpec((1, tn), lambda i, j, k: (0, j))
        out = pl.pallas_call(
            functools.partial(_linear_bias_kernel, mxu_dtype=mxu_dtype),
            out_shape=jax.ShapeDtypeStruct((Mp, Np), out_dtype),
            grid=grid,
            in_specs=[x_spec, w_spec, b_spec],
            out_specs=o_spec,
            scratch_shapes=scratch,
            compiler_params=cparams,
            cost_estimate=cost,
        )(x2d, w_io, b)

    if (Mp, Np) != (M, N):
        out = out[:M, :N]
    return out


# -----------------------------------------------------------------------------
# Kernel 2: scaled dot-product attention
#   grid = (B, H, Sq_tiles)           full-KV path (weights are emitted)
#   grid = (B, H, Sq_tiles, Sk_tiles) flash / online-softmax path (ctx only)
# -----------------------------------------------------------------------------
def _qk_scores(q, k, scale, mxu_dtype):
    # q: (tq, dk), k: (tk, dk) -> (tq, tk); contract last dims (no K transpose).
    if scale != 1.0:
        q = q * scale
    return jax.lax.dot_general(
        q.astype(mxu_dtype), k.astype(mxu_dtype),
        dimension_numbers=(((1,), (1,)), ((), ())),
        preferred_element_type=jnp.float32)


def _refined_recip(l):
    r = pl.reciprocal(l, approx=True)    # EUP slot
    return r * (2.0 - l * r)             # one Newton step -> ~f32 exact


def _attn_weights_kernel(q_ref, k_ref, v_ref, ctx_ref, w_ref, *, scale, mxu_dtype):
    # One (tq, dk) query block vs the whole (Sk, dk) K/V of one head.
    s = _qk_scores(q_ref[...], k_ref[...], scale, mxu_dtype)        # (tq, Sk) f32
    m = jnp.max(s, axis=-1, keepdims=True)
    e = jnp.exp(s - m)
    l = jnp.sum(e, axis=-1, keepdims=True)
    w = e * _refined_recip(l)
    w_ref[...] = w.astype(w_ref.dtype)
    ctx = jnp.dot(w.astype(mxu_dtype), v_ref[...].astype(mxu_dtype),
                  preferred_element_type=jnp.float32)
    ctx_ref[...] = ctx.astype(ctx_ref.dtype)


def _attn_flash_kernel(q_ref, k_ref, v_ref, ctx_ref, m_sc, l_sc, acc_sc, *,
                       scale, mxu_dtype):
    ki = pl.program_id(3)

    @pl.when(ki == 0)
    def _():
        m_sc[...] = jnp.full(m_sc.shape, -jnp.inf, m_sc.dtype)
        l_sc[...] = jnp.zeros(l_sc.shape, l_sc.dtype)
        acc_sc[...] = jnp.zeros(acc_sc.shape, acc_sc.dtype)

    s = _qk_scores(q_ref[...], k_ref[...], scale, mxu_dtype)        # (tq, tk) f32
    m_new = jnp.maximum(m_sc[...], jnp.max(s, axis=-1, keepdims=True))
    alpha = jnp.exp(m_sc[...] - m_new)
    p = jnp.exp(s - m_new)
    l_sc[...] = alpha * l_sc[...] + jnp.sum(p, axis=-1, keepdims=True)
    acc_sc[...] = alpha * acc_sc[...] + jnp.dot(
        p.astype(mxu_dtype), v_ref[...].astype(mxu_dtype),
        preferred_element_type=jnp.float32)
    m_sc[...] = m_new

    @pl.when(ki == pl.num_programs(3) - 1)
    def _():
        ctx_ref[...] = (acc_sc[...] * _refined_recip(l_sc[...])).astype(ctx_ref.dtype)


def dot_product_attention(q, k, v, *, scaled=True, return_weights=True,
                          weights_dtype=None, mxu_dtype=None, tq=None, tk=None):
    """q: (B, H, Sq, dk); k, v: (B, H, Sk, dk).

    return_weights=True  -> (context, weights), full-KV softmax per Sq block.
    return_weights=False -> context only, online softmax over an Sk grid axis
                            (bounded VMEM; preferred hot path for long Sk).
    """
    B, H, Sq, dk = q.shape
    Sk = k.shape[2]
    scale = 1.0 / math.sqrt(dk) if scaled else 1.0
    if mxu_dtype is None:
        mxu_dtype = q.dtype
    if weights_dtype is None:
        weights_dtype = q.dtype

    v5e = _is_v5e()
    tq = _pick_tile(Sq, tq if tq is not None else (128 if v5e else 256), 8)
    Sqp = _round_up(Sq, tq)
    if Sqp != Sq:
        # Padded query rows produce finite (uniform-softmax) junk and are sliced off.
        q = jnp.pad(q, ((0, 0), (0, 0), (0, Sqp - Sq), (0, 0)))
    nq = Sqp // tq

    itm = jnp.dtype(q.dtype).itemsize
    mxu_b = jnp.dtype(mxu_dtype).itemsize
    flops = 4 * B * H * Sqp * Sk * dk

    if return_weights:
        q_spec = pl.BlockSpec((None, None, tq, dk), lambda b, h, qi: (b, h, qi, 0))
        kv_spec = pl.BlockSpec((None, None, Sk, dk), lambda b, h, qi: (b, h, 0, 0))
        ctx_spec = pl.BlockSpec((None, None, tq, dk), lambda b, h, qi: (b, h, qi, 0))
        w_spec = pl.BlockSpec((None, None, tq, Sk), lambda b, h, qi: (b, h, qi, 0))
        est = (2 * itm * (2 * tq * dk + 2 * Sk * dk + tq * Sk)
               + 4 * 3 * tq * Sk
               + mxu_b * (tq * dk + 2 * Sk * dk + tq * Sk))
        cost = pl.CostEstimate(
            flops=flops, transcendentals=B * H * Sqp * Sk,
            bytes_accessed=itm * B * H * (2 * Sqp * dk + 2 * Sk * dk)
            + jnp.dtype(weights_dtype).itemsize * B * H * Sqp * Sk)
        ctx, w = pl.pallas_call(
            functools.partial(_attn_weights_kernel, scale=scale, mxu_dtype=mxu_dtype),
            out_shape=(jax.ShapeDtypeStruct((B, H, Sqp, dk), q.dtype),
                       jax.ShapeDtypeStruct((B, H, Sqp, Sk), weights_dtype)),
            grid=(B, H, nq),
            in_specs=[q_spec, kv_spec, kv_spec],
            out_specs=(ctx_spec, w_spec),
            compiler_params=pltpu.CompilerParams(
                dimension_semantics=("parallel", "parallel", "parallel"),
                vmem_limit_bytes=_vmem_limit(est)),
            cost_estimate=cost,
        )(q, k, v)
        if Sqp != Sq:
            ctx, w = ctx[:, :, :Sq, :], w[:, :, :Sq, :]
        return ctx, w

    # flash path (no weights writeback)
    tk = _pick_tile(Sk, tk if tk is not None else (256 if v5e else 512), 8)
    if Sk % tk != 0:
        # TODO(synk): masked ragged-Sk tiles not implemented; fall back to one KV block.
        tk = Sk
    nk = Sk // tk
    q_spec = pl.BlockSpec((None, None, tq, dk), lambda b, h, qi, ki: (b, h, qi, 0))
    kv_spec = pl.BlockSpec((None, None, tk, dk), lambda b, h, qi, ki: (b, h, ki, 0))
    ctx_spec = pl.BlockSpec((None, None, tq, dk), lambda b, h, qi, ki: (b, h, qi, 0))
    est = (2 * itm * (2 * tq * dk + 2 * tk * dk)
           + 4 * 3 * tq * tk
           + 4 * tq * (dk + 2)
           + mxu_b * (tq * dk + 2 * tk * dk + tq * tk))
    cost = pl.CostEstimate(flops=flops, transcendentals=B * H * Sqp * Sk,
                           bytes_accessed=itm * B * H * (2 * Sqp * dk + 2 * Sk * dk))
    ctx = pl.pallas_call(
        functools.partial(_attn_flash_kernel, scale=scale, mxu_dtype=mxu_dtype),
        out_shape=jax.ShapeDtypeStruct((B, H, Sqp, dk), q.dtype),
        grid=(B, H, nq, nk),
        in_specs=[q_spec, kv_spec, kv_spec],
        out_specs=ctx_spec,
        scratch_shapes=[pltpu.VMEM((tq, 1), jnp.float32),
                        pltpu.VMEM((tq, 1), jnp.float32),
                        pltpu.VMEM((tq, dk), jnp.float32)],
        compiler_params=pltpu.CompilerParams(
            dimension_semantics=("parallel", "parallel", "parallel", "arbitrary"),
            vmem_limit_bytes=_vmem_limit(est)),
        cost_estimate=cost,
    )(q, k, v)
    if Sqp != Sq:
        ctx = ctx[:, :, :Sq, :]
    return ctx


# -----------------------------------------------------------------------------
# MultiHeadAttention wrapper (parameter setup + view-style reshapes in JAX)
# -----------------------------------------------------------------------------
class MultiHeadAttention:
    def __init__(self, key, query_hidden_size, keys_hidden_size, values_hidden_size,
                 out_hidden_size, num_heads, hidden_size=512,
                 mxu_dtype=jnp.bfloat16):
        if hidden_size % num_heads != 0:
            raise RuntimeError("hidden_size must be divisible by num_heads")
        self.num_heads = num_heads
        self.hidden_size = hidden_size
        self.d_k = hidden_size // num_heads
        self.out_hidden_size = out_hidden_size
        self.mxu_dtype = mxu_dtype   # MXU operand dtype; accumulation is always f32

        # Weights stored pre-transposed as (in, out): no per-call transpose op.
        def init_w(k, in_f, out_f):
            bound = 1.0 / math.sqrt(in_f)
            return jax.random.uniform(k, (in_f, out_f), jnp.float32, -bound, bound)

        kq, kk, kv, ko, kb = jax.random.split(key, 5)
        self.Wq = init_w(kq, query_hidden_size, hidden_size)   # no bias
        self.Wk = init_w(kk, keys_hidden_size, hidden_size)    # no bias
        self.Wv = init_w(kv, values_hidden_size, hidden_size)  # no bias
        self.Wout = init_w(ko, hidden_size, out_hidden_size)
        bound_o = 1.0 / math.sqrt(hidden_size)
        self.Wout_b = jax.random.uniform(
            kb, (out_hidden_size,), jnp.float32, -bound_o, bound_o)
        # 1/sqrt(d_k) folded into the query projection once at init: the softmax
        # of scaled scores (and hence weights/context) is unchanged.
        self.Wq_scaled = self.Wq * (1.0 / math.sqrt(self.d_k))

    def __call__(self, query, keys, values, mask=None, return_weights=True):
        # TODO(synk): optional attention-mask path (masked_fill) not implemented.
        B, Sq, _ = query.shape
        Sk = keys.shape[1]
        nh, dk, H = self.num_heads, self.d_k, self.hidden_size
        md = self.mxu_dtype

        # Projections (tiled Pallas matmuls), then the module's .view reshape
        # (a raw reinterpret, NOT a transpose) to (B, nh, S, dk).
        q = linear(query.reshape(B * Sq, -1), self.Wq_scaled,
                   mxu_dtype=md).reshape(B, nh, Sq, dk)
        k = linear(keys.reshape(B * Sk, -1), self.Wk,
                   mxu_dtype=md).reshape(B, nh, Sk, dk)
        v = linear(values.reshape(B * Sk, -1), self.Wv,
                   mxu_dtype=md).reshape(B, nh, Sk, dk)

        if return_weights:
            context, weights = dot_product_attention(
                q, k, v, scaled=False, return_weights=True, mxu_dtype=md)
        else:
            context = dot_product_attention(
                q, k, v, scaled=False, return_weights=False, mxu_dtype=md)
            weights = None

        # combine_heads: plain reshape back to (B*Sq, hidden) — free (reinterpret).
        context = context.reshape(B * Sq, H)
        out = linear(context, self.Wout, self.Wout_b,
                     mxu_dtype=md).reshape(B, Sq, self.out_hidden_size)
        return out, weights


# -----------------------------------------------------------------------------
# Pure-JAX f32 reference mirroring the PyTorch forward (correctness check)
# -----------------------------------------------------------------------------
def ref_forward(mha, query, keys, values):
    B, Sq, _ = query.shape
    Sk = keys.shape[1]
    nh, dk, H = mha.num_heads, mha.d_k, mha.hidden_size
    hp = jax.lax.Precision.HIGHEST
    q = jnp.matmul(query.reshape(B * Sq, -1), mha.Wq, precision=hp).reshape(B, nh, Sq, dk)
    k = jnp.matmul(keys.reshape(B * Sk, -1), mha.Wk, precision=hp).reshape(B, nh, Sk, dk)
    v = jnp.matmul(values.reshape(B * Sk, -1), mha.Wv, precision=hp).reshape(B, nh, Sk, dk)
    scores = jnp.einsum("bhqd,bhkd->bhqk", q, k, precision=hp) / math.sqrt(dk)
    w = jax.nn.softmax(scores, axis=-1)
    ctx = jnp.einsum("bhqk,bhkd->bhqd", w, v, precision=hp).reshape(B, Sq, H)
    out = jnp.matmul(ctx, mha.Wout, precision=hp) + mha.Wout_b
    return out, w


if __name__ == "__main__":
    B, Sq, Sk = 2, 8, 16
    query_hidden, keys_hidden, values_hidden, out_hidden = 32, 24, 40, 16
    num_heads, hidden_size = 4, 32

    key = jax.random.PRNGKey(0)
    kp, kq, kk, kv = jax.random.split(key, 4)
    query = jax.random.normal(kq, (B, Sq, query_hidden), jnp.float32)
    keys = jax.random.normal(kk, (B, Sk, keys_hidden), jnp.float32)
    values = jax.random.normal(kv, (B, Sk, values_hidden), jnp.float32)

    # f32 MXU path: tight check against the pure-JAX f32 reference.
    mha_f32 = MultiHeadAttention(kp, query_hidden, keys_hidden, values_hidden,
                                 out_hidden, num_heads, hidden_size,
                                 mxu_dtype=jnp.float32)
    out, weights = mha_f32(query, keys, values)
    out = jax.block_until_ready(out)
    weights = jax.block_until_ready(weights)
    ref_out, ref_w = ref_forward(mha_f32, query, keys, values)
    assert out.shape == (B, Sq, out_hidden)
    assert weights.shape == (B, num_heads, Sq, Sk)
    assert jnp.allclose(out, ref_out, atol=5e-3, rtol=5e-3)
    assert jnp.allclose(weights, ref_w, atol=5e-3, rtol=5e-3)

    # bf16 MXU operands / f32 accumulation (default per perf review): looser tol.
    mha_bf16 = MultiHeadAttention(kp, query_hidden, keys_hidden, values_hidden,
                                  out_hidden, num_heads, hidden_size,
                                  mxu_dtype=jnp.bfloat16)
    out_b, w_b = mha_bf16(query, keys, values)
    out_b = jax.block_until_ready(out_b)
    assert jnp.allclose(out_b, ref_out, atol=3e-2, rtol=3e-2)
    assert jnp.allclose(w_b, ref_w, atol=3e-2, rtol=3e-2)

    # Flash (online-softmax over Sk, no weights writeback) vs full-softmax path.
    dk = hidden_size // num_heads
    qh = (query.reshape(B * Sq, -1) @ mha_f32.Wq).reshape(B, num_heads, Sq, dk)
    kh = (keys.reshape(B * Sk, -1) @ mha_f32.Wk).reshape(B, num_heads, Sk, dk)
    vh = (values.reshape(B * Sk, -1) @ mha_f32.Wv).reshape(B, num_heads, Sk, dk)
    ctx_a, _ = dot_product_attention(qh, kh, vh, return_weights=True,
                                     mxu_dtype=jnp.float32)
    ctx_b = dot_product_attention(qh, kh, vh, return_weights=False,
                                  mxu_dtype=jnp.float32)
    ctx_b = jax.block_until_ready(ctx_b)
    assert jnp.allclose(ctx_a, ctx_b, atol=1e-4, rtol=1e-4)

    print("KERNEL_OK")
</pallas_src>

<mosaic_0001>
module attributes {stable_mosaic.version = 11 : i64} {
  func.func @_linear_nobias_kernel(%arg0: i32, %arg1: i32, %arg2: i32, %arg3: memref<16x32xf32, #tpu.memory_space<vmem>>, %arg4: memref<32x32xf32, #tpu.memory_space<vmem>>, %arg5: memref<16x32xf32, #tpu.memory_space<vmem>>, %arg6: memref<16x32xf32, #tpu.memory_space<vmem>>) attributes {dimension_semantics = [#tpu.dimension_semantics<parallel>, #tpu.dimension_semantics<parallel>, #tpu.dimension_semantics<arbitrary>], iteration_bounds = array<i64: 1, 1, 1>, scalar_prefetch = 0 : i64, scratch_operands = 1 : i64, tpu.core_type = #tpu.core_type<tc>, window_params = [{transform_indices = @transform_0, window_bounds = array<i64: 16, 32>}, {transform_indices = @transform_1, window_bounds = array<i64: 32, 32>}, {transform_indices = @transform_2, window_bounds = array<i64: 16, 32>}]} {
    %c0_i32 = arith.constant 0 : i32
    %0 = arith.cmpi eq, %arg2, %c0_i32 : i32
    %1 = arith.extui %0 : i1 to i32
    %c0_i32_0 = arith.constant 0 : i32
    %2 = arith.cmpi ne, %1, %c0_i32_0 : i32
    scf.if %2 {
      %cst_10 = arith.constant 0.000000e+00 : f32
      %12 = vector.broadcast %cst_10 : f32 to vector<16x32xf32>
      %c0_11 = arith.constant 0 : index
      %c0_12 = arith.constant 0 : index
      %13 = vector.load %arg6[%c0_11, %c0_12] : memref<16x32xf32, #tpu.memory_space<vmem>>, vector<16x32xf32>
      tpu.vector_store %arg6[%c0_11, %c0_12], %12 {strides = array<i32>} : memref<16x32xf32, #tpu.memory_space<vmem>>, vector<16x32xf32>,
    } else {
    }
    %c0 = arith.constant 0 : index
    %c0_1 = arith.constant 0 : index
    %3 = vector.load %arg6[%c0, %c0_1] : memref<16x32xf32, #tpu.memory_space<vmem>>, vector<16x32xf32>
    %c0_2 = arith.constant 0 : index
    %c0_3 = arith.constant 0 : index
    %4 = vector.load %arg3[%c0_2, %c0_3] : memref<16x32xf32, #tpu.memory_space<vmem>>, vector<16x32xf32>
    %c0_4 = arith.constant 0 : index
    %c0_5 = arith.constant 0 : index
    %5 = vector.load %arg4[%c0_4, %c0_5] : memref<32x32xf32, #tpu.memory_space<vmem>>, vector<32x32xf32>
    %cst = arith.constant dense<0.000000e+00> : vector<16x32xf32>
    %6 = tpu.matmul %4, %5, %cst {dimension_numbers = #tpu.dot_dimension_numbers<[1], [0], [0], [1], [0, 0, 1, 1], [], []>} : vector<16x32xf32>, vector<32x32xf32>, vector<16x32xf32> -> vector<16x32xf32>
    %7 = arith.addf %3, %6 : vector<16x32xf32>
    %c0_6 = arith.constant 0 : index
    %c0_7 = arith.constant 0 : index
    %8 = vector.load %arg6[%c0_6, %c0_7] : memref<16x32xf32, #tpu.memory_space<vmem>>, vector<16x32xf32>
    tpu.vector_store %arg6[%c0_6, %c0_7], %7 {strides = array<i32>} : memref<16x32xf32, #tpu.memory_space<vmem>>, vector<16x32xf32>,
    %c0_i32_8 = arith.constant 0 : i32
    %9 = arith.cmpi eq, %arg2, %c0_i32_8 : i32
    %10 = arith.extui %9 : i1 to i32
    %c0_i32_9 = arith.constant 0 : i32
    %11 = arith.cmpi ne, %10, %c0_i32_9 : i32
    scf.if %11 {
      %c0_10 = arith.constant 0 : index
      %c0_11 = arith.constant 0 : index
      %12 = vector.load %arg6[%c0_10, %c0_11] : memref<16x32xf32, #tpu.memory_space<vmem>>, vector<16x32xf32>
      %c0_12 = arith.constant 0 : index
      %c0_13 = arith.constant 0 : index
      %13 = vector.load %arg5[%c0_12, %c0_13] : memref<16x32xf32, #tpu.memory_space<vmem>>, vector<16x32xf32>
      tpu.vector_store %arg5[%c0_12, %c0_13], %12 {strides = array<i32>} : memref<16x32xf32, #tpu.memory_space<vmem>>, vector<16x32xf32>,
    } else {
    }
    return
  }
  func.func @transform_0(%arg0: i32, %arg1: i32, %arg2: i32) -> (i32, i32) {
    %c0_i32 = arith.constant 0 : i32
    return %arg0, %arg2 : i32, i32
  }
  func.func @transform_1(%arg0: i32, %arg1: i32, %arg2: i32) -> (i32, i32) {
    %c0_i32 = arith.constant 0 : i32
    return %arg2, %arg1 : i32, i32
  }
  func.func @transform_2(%arg0: i32, %arg1: i32, %arg2: i32) -> (i32, i32) {
    %c0_i32 = arith.constant 0 : i32
    return %arg0, %arg1 : i32, i32
  }
}

</mosaic_0001>

<llo_original>
// kernel: tpu_custom_call.1
$region0: #{tpu_custom_call.1}
  #allocation0 [shape = 'u32[]', space=smem, size = 0x4, offset = 0x4, fixed_abs, tag = 'smem constant byte address 0x4 - core index']
  #allocation1 [shape = 'u32[144,128]{1,0:T(1,128)}', space=vmem, size = 0x12000, scoped, tag = 'internal scratch']
  #allocation2 [shape = 'f32[16,32]{1,0:T(8,128)}', space=vmem, size = 0x2000, scoped, tag = 'scratch operand']
  %s0 = inlined_call_operand.hbm [shape: f32[16,32], index: 0, kind: input, shape index: {}]
  %s1 = inlined_call_operand.hbm [shape: f32[32,32], index: 1, kind: input, shape index: {}]
  %s2 = inlined_call_operand.hbm [shape: f32[16,32], index: 2, kind: output, shape index: {}]
  %s3 = sld [smem:[#allocation0]]
  $region34: #{tpu_custom_call.1} parent=0
    _
  %s5 = ssub.s32 1, %s3
  %s6 = scalar_select 0, %s5, %s3
  $region1: #{tpu_custom_call.1} parent=0
    #allocation3 [shape = 'u8[8192]{0}', space=vmem, size = 0x2000, scoped, tag = 'input window, operand 0, single buffered']
    #allocation4 [shape = 's32[1]{0}', space=sflag, size = 0x4, scoped, tag = 'scoped memory for tpu_custom_call.1']
    #allocation5 [shape = 's32[1]{0}', space=sflag, size = 0x4, scoped, tag = 'scoped memory for tpu_custom_call.1']
    #allocation6 [shape = 'u8[16384]{0}', space=vmem, size = 0x4000, scoped, tag = 'input window, operand 1, single buffered']
    #allocation7 [shape = 's32[1]{0}', space=sflag, size = 0x4, scoped, tag = 'scoped memory for tpu_custom_call.1']
    #allocation8 [shape = 'u8[8192]{0}', space=vmem, size = 0x2000, scoped, tag = 'output window, operand 0, single buffered']
    %7 = vsyncpa [#allocation4], 0
    %8 = vsyncpa [#allocation7], 0
    %9 = vsyncpa [#allocation5], 0
    // Predicated region
    $region2: #{tpu_custom_call.1} parent=1 // pred_check
      _
    $region3: #{tpu_custom_call.1} parent=1 // pred_check_branch
      %11 = sbr.rel (0) target = $region5
    $region4: #{tpu_custom_call.1} parent=1 // pred_region
      %s13 = ssub.s32 256, 256
      %14 = vsyncadd [#allocation4], %s13
      %s15 = sshll.u32 [#allocation3], 4
      %s16 = int_to_ptr.vmem [resolvable:$true] %s15
      %21 = dma.hbm_to_vmem [thread:$0]  %s0, 256, %s16, [#allocation4], 128, 128, 8
    $region5: #{tpu_custom_call.1} parent=1 // pred_fallthru
      _
    // Predicated region
    $region6: #{tpu_custom_call.1} parent=1 // pred_check
      _
    $region7: #{tpu_custom_call.1} parent=1 // pred_check_branch
      %23 = sbr.rel (0) target = $region9
    $region8: #{tpu_custom_call.1} parent=1 // pred_region
      %s25 = ssub.s32 512, 512
      %26 = vsyncadd [#allocation7], %s25
      %s27 = sshll.u32 [#allocation6], 4
      %s28 = int_to_ptr.vmem [resolvable:$true] %s27
      %33 = dma.hbm_to_vmem [thread:$0]  %s1, 512, %s28, [#allocation7], 128, 128, 8
    $region9: #{tpu_custom_call.1} parent=1 // pred_fallthru
      _
    // Predicated region
    $region10: #{tpu_custom_call.1} parent=1 // pred_check
      _
    $region11: #{tpu_custom_call.1} parent=1 // pred_check_branch
      %35 = sbr.rel (0) target = $region13
    $region12: #{tpu_custom_call.1} parent=1 // pred_region
      %36 = dma.done [#allocation4], 256
    $region13: #{tpu_custom_call.1} parent=1 // pred_fallthru
      _
    // Predicated region
    $region14: #{tpu_custom_call.1} parent=1 // pred_check
      _
    $region15: #{tpu_custom_call.1} parent=1 // pred_check_branch
      %38 = sbr.rel (0) target = $region17
    $region16: #{tpu_custom_call.1} parent=1 // pred_region
      %39 = dma.done [#allocation7], 512
    $region17: #{tpu_custom_call.1} parent=1 // pred_fallthru
      _
    %p40 = scmp.eq.s32.totalorder 0, 0
    // Predicated region
    $region18: #{tpu_custom_call.1} parent=1 // pred_check
      %p41 = pneg %p40
    $region19: #{tpu_custom_call.1} parent=1 // pred_check_branch
      %43 = sbr.rel (%p41) target = $region21
    $region20: #{tpu_custom_call.1} parent=1 // pred_region
      %vm44 = vcmask 261120
      %45 = vst.msk [vmem:[#allocation2] sm:$0xff] %vm44, 0.0
      %46 = vst.msk [vmem:[#allocation2 + $0x8] sm:$0xff] %vm44, 0.0
    $region21: #{tpu_custom_call.1} parent=1 // pred_fallthru
      _
    %v47 = vld [vmem:[#allocation2] sm:$0xff]
    %v48 = vld [vmem:[#allocation2 + $0x8] sm:$0xff]
    %v49 = vld [vmem:[#allocation3] sm:$0xff]
    %v50 = vld [vmem:[#allocation3 + $0x8] sm:$0xff]
    %v51 = vld [vmem:[#allocation6] sm:$0xff]
    %v52 = vld [vmem:[#allocation6 + $0x8] sm:$0xff]
    %v53 = vld [vmem:[#allocation6 + $0x10] sm:$0xff]
    %v54 = vld [vmem:[#allocation6 + $0x18] sm:$0xff]
    %vm55 = vcmask 261120
    %v57 = vsel %vm55, %v49, 0
    %v60 = vsel %vm55, %v50, 0
    %62 = vmatprep.subr.mxu0 0.0
    %63 = vmatpush1.msra.mxu0 %v51
    %64 = vmatprep.subr.mxu0 0.0
    %65 = vmatpush1.msra.mxu0 %v52
    %66 = vmatprep.subr.mxu0 0.0
    %67 = vmatpush1.msra.mxu0 %v53
    %68 = vmatprep.subr.mxu0 0.0
    %69 = vmatpush1.msra.mxu0 %v54
    %70 = vmatprep.subr.mxu0 0.0
    %71 = vmatpush1.msra.mxu0 0.0
    %72 = vmatprep.subr.mxu0 0.0
    %73 = vmatpush1.msra.mxu0 0.0
    %74 = vmatprep.subr.mxu0 0.0
    %75 = vmatpush1.msra.mxu0 0.0
    %76 = vmatprep.subr.mxu0 0.0
    %77 = vmatpush1.msra.mxu0 0.0
    %78 = vmatprep.subr.mxu0 0.0
    %79 = vmatpush1.msra.mxu0 0.0
    %80 = vmatprep.subr.mxu0 0.0
    %81 = vmatpush1.msra.mxu0 0.0
    %82 = vmatprep.subr.mxu0 0.0
    %83 = vmatpush1.msra.mxu0 0.0
    %84 = vmatprep.subr.mxu0 0.0
    %85 = vmatpush1.msra.mxu0 0.0
    %86 = vmatprep.subr.mxu0 0.0
    %87 = vmatpush1.msra.mxu0 0.0
    %88 = vmatprep.subr.mxu0 0.0
    %89 = vmatpush1.msra.mxu0 0.0
    %90 = vmatprep.subr.mxu0 0.0
    %91 = vmatpush1.msra.mxu0 0.0
    %92 = vmatprep.subr.mxu0 0.0
    %93 = vmatpush1.msra.mxu0 0.0
    %94 = vmatprep.subr.mxu0 0.0
    %95 = vmatpush1.msra.mxu0 0.0
    %96 = vmatprep.subr.mxu0 0.0
    %97 = vmatpush1.msra.mxu0 0.0
    %98 = vmatprep.subr.mxu0 0.0
    %99 = vmatpush1.msra.mxu0 0.0
    %100 = vmatprep.subr.mxu0 0.0
    %101 = vmatpush1.msra.mxu0 0.0
    %102 = vmatprep.subr.mxu0 0.0
    %103 = vmatpush1.msra.mxu0 0.0
    %104 = vmatprep.subr.mxu0 0.0
    %105 = vmatpush1.msra.mxu0 0.0
    %106 = vmatprep.subr.mxu0 0.0
    %107 = vmatpush1.msra.mxu0 0.0
    %108 = vmatprep.subr.mxu0 0.0
    %109 = vmatpush1.msra.mxu0 0.0
    %110 = vmatprep.subr.mxu0 0.0
    %111 = vmatpush1.msra.mxu0 0.0
    %112 = vmatprep.subr.mxu0 0.0
    %113 = vmatpush1.msra.mxu0 0.0
    %114 = vmatprep.subr.mxu0 0.0
    %115 = vmatpush1.msra.mxu0 0.0
    %116 = vmatprep.subr.mxu0 0.0
    %117 = vmatpush1.msra.mxu0 0.0
    %118 = vmatprep.subr.mxu0 0.0
    %119 = vmatpush1.msra.mxu0 0.0
    %120 = vmatprep.subr.mxu0 0.0
    %121 = vmatpush1.msra.mxu0 0.0
    %122 = vmatprep.subr.mxu0 0.0
    %123 = vmatpush1.msra.mxu0 0.0
    %124 = vmatprep.subr.mxu0 0.0
    %125 = vmatpush1.msra.mxu0 0.0
    %126 = vmatprep.mubr.f32.mxu0 0.0
    %127 = vmatmul.mubr.f32.gmra.mrb[0].mxu0 %v57
    %v128 = vpop.f32.mrb[0].mxu0
    %v129 = vadd.f32 0.0, %v128
    %v130 = vpop.f32.mrb[0].mxu0
    %131 = vmatprep.mubr.f32.mxu0 0.0
    %132 = vmatmul.mubr.f32.gmra.mrb[0].mxu0 %v60
    %v133 = vpop.f32.mrb[0].mxu0
    %v134 = vadd.f32 0.0, %v133
    %v135 = vpop.f32.mrb[0].mxu0
    %136 = vdwg.mxu0
    %v137 = vadd.f32 %v47, %v129
    %v138 = vadd.f32 %v48, %v134
    %139 = vst.msk [vmem:[#allocation2] sm:$0xff] %vm55, %v137
    %140 = vst.msk [vmem:[#allocation2 + $0x8] sm:$0xff] %vm55, %v138
    // Predicated region
    $region22: #{tpu_custom_call.1} parent=1 // pred_check
      %p141 = pneg %p40
    $region23: #{tpu_custom_call.1} parent=1 // pred_check_branch
      %143 = sbr.rel (%p141) target = $region25
    $region24: #{tpu_custom_call.1} parent=1 // pred_region
      %v144 = vld [vmem:[#allocation2] sm:$0xff]
      %v145 = vld [vmem:[#allocation2 + $0x8] sm:$0xff]
      %146 = vst.msk [vmem:[#allocation8] sm:$0xff] %vm55, %v144
      %147 = vst.msk [vmem:[#allocation8 + $0x8] sm:$0xff] %vm55, %v145
    $region25: #{tpu_custom_call.1} parent=1 // pred_fallthru
      _
    // Predicated region
    $region26: #{tpu_custom_call.1} parent=1 // pred_check
      _
    $region27: #{tpu_custom_call.1} parent=1 // pred_check_branch
      %149 = sbr.rel (0) target = $region29
    $region28: #{tpu_custom_call.1} parent=1 // pred_region
      %s151 = ssub.s32 256, 256
      %152 = vsyncadd [#allocation5], %s151
      %s153 = sshll.u32 [#allocation8], 4
      %s154 = int_to_ptr.vmem [resolvable:$true] %s153
      %159 = dma.vmem_to_hbm [thread:$0]  %s154, 256, %s2, [#allocation5], 128, 128, 8
    $region29: #{tpu_custom_call.1} parent=1 // pred_fallthru
      _
    // Predicated region
    $region30: #{tpu_custom_call.1} parent=1 // pred_check
      _
    $region31: #{tpu_custom_call.1} parent=1 // pred_check_branch
      %161 = sbr.rel (0) target = $region33
    $region32: #{tpu_custom_call.1} parent=1 // pred_region
      %162 = dma.done [#allocation5], 256
    $region33: #{tpu_custom_call.1} parent=1 // pred_fallthru
      _
    %163 = vsyncpa [#allocation4], 1
    %164 = vsyncpa [#allocation7], 1
    %165 = vsyncpa [#allocation5], 1

</llo_original>
